<compile_context>
chip_gen: v7x
topology: tpu7x:2x2x1
jax: 0.10.0
libtpu: 0.0.40
codegen_flags: <defaults>
</compile_context>

<pallas_src>
import math
from functools import partial

import numpy as np
import jax
import jax.numpy as jnp
from jax import lax
from jax.experimental import pallas as pl
from jax.experimental.pallas import tpu as pltpu


def _round_up(x, m):
    return (x + m - 1) // m * m


def _vmem_capacity_bytes():
    try:
        return int(pltpu.get_tpu_info().vmem_capacity_bytes)
    except Exception:
        return 64 * 1024 * 1024  # conservative (v7x per-TC)


def _self_attention_kernel(
    q_ref, k_ref, v_ref,
    wq_ref, bq_ref,
    wk_ref, bk_ref,
    wv_ref, bv_ref,
    wo_ref, bo_ref,
    o_ref,
    *, inv_sqrt_dk, seq_len, compute_dtype,
):
    Bt, S, A = q_ref.shape          # batch tile, padded seq, padded amp_dim
    D = wq_ref.shape[1]             # padded att_dim
    cdt = compute_dtype

    def as_cdt(x):
        # No-op when the wrapper already pre-cast the array to the compute dtype.
        return x if x.dtype == cdt else x.astype(cdt)

    # ---- projections: flatten (Bt, S, A) -> (Bt*S, A) so MXU M dim is filled ----
    q2 = as_cdt(q_ref[...]).reshape(Bt * S, A)
    k2 = as_cdt(k_ref[...]).reshape(Bt * S, A)
    v2 = as_cdt(v_ref[...]).reshape(Bt * S, A)

    wq = as_cdt(wq_ref[...])
    wk = as_cdt(wk_ref[...])
    wv = as_cdt(wv_ref[...])
    wo = as_cdt(wo_ref[...])

    # Bias add + scale in f32.  Fold 1/sqrt(d_k) into qp (S*D elements, not S*S).
    qp = (jnp.dot(q2, wq, preferred_element_type=jnp.float32) + bq_ref[...]) * inv_sqrt_dk
    kp = jnp.dot(k2, wk, preferred_element_type=jnp.float32) + bk_ref[...]
    vp = jnp.dot(v2, wv, preferred_element_type=jnp.float32) + bv_ref[...]

    qp3 = qp.reshape(Bt, S, D)
    kp3 = kp.reshape(Bt, S, D)
    vp3 = vp.reshape(Bt, S, D)

    if seq_len < S:
        # Zero the padded rows of the V projection (they equal the bias otherwise).
        # scores @ vp then ignores padded K/V columns automatically; this touches
        # only (S - seq_len)*D elements instead of masking the S*S score tile.
        row_idx = lax.broadcasted_iota(jnp.int32, (Bt, S, D), 1)
        vp3 = jnp.where(row_idx < seq_len, vp3, 0.0)

    qp3 = qp3.astype(cdt)
    kp3 = kp3.astype(cdt)
    vp3 = vp3.astype(cdt)

    # scores = sigmoid(q @ k^T / sqrt(d_k))  -- NOTE: sigmoid, not softmax.
    # Batched dot_general contracting the last axis of both operands (no kp.T).
    scores = lax.dot_general(
        qp3, kp3,
        dimension_numbers=(((2,), (2,)), ((0,), (0,))),
        preferred_element_type=jnp.float32)            # (Bt, S, S) f32
    scores = jax.nn.sigmoid(scores)

    att = lax.dot_general(
        scores.astype(cdt), vp3,
        dimension_numbers=(((2,), (1,)), ((0,), (0,))),
        preferred_element_type=jnp.float32)            # (Bt, S, D) f32

    out = jnp.dot(att.reshape(Bt * S, D).astype(cdt), wo,
                  preferred_element_type=jnp.float32) + bo_ref[...]
    o_ref[...] = out.reshape(Bt, S, A).astype(o_ref.dtype)


def self_attention_layer(q, k, v, params, amp_dim, *,
                         block_b=None, compute_dtype=jnp.bfloat16, out_dtype=None):
    """q, k, v: (B, S, amp_dim).  Weights stored (in, out).  Returns (B, S, amp_dim)."""
    wq, bq, wk, bk, wv, bv, wo, bo = params
    B, S, A = q.shape
    D = wq.shape[1]
    assert A == amp_dim == wq.shape[0]

    cdt_np = np.dtype(compute_dtype)
    out_dtype = q.dtype if out_dtype is None else out_dtype
    out_np = np.dtype(out_dtype)

    # --- pad to lane/sublane aligned shapes: features -> x128, seq -> x16/x8 ----
    A_p = _round_up(A, 128)
    D_p = _round_up(D, 128)
    S_p = _round_up(S, 16 if cdt_np == np.dtype(jnp.bfloat16) else 8)

    def pad2(w, r, c):
        return jnp.pad(w, ((0, r - w.shape[0]), (0, c - w.shape[1])))

    # Weights in compute dtype (HBM side) -> half DMA bytes for bf16; biases stay f32.
    wq_p, wk_p, wv_p = (pad2(w, A_p, D_p).astype(cdt_np) for w in (wq, wk, wv))
    wo_p = pad2(wo, D_p, A_p).astype(cdt_np)
    bq_p, bk_p, bv_p = (pad2(b, 1, D_p).astype(jnp.float32) for b in (bq, bk, bv))
    bo_p = pad2(bo, 1, A_p).astype(jnp.float32)

    # --- VMEM footprint model (per grid step) -----------------------------------
    in_bytes = cdt_np.itemsize
    out_bytes = out_np.itemsize
    vmem_cap = _vmem_capacity_bytes()
    vmem_budget = int(0.75 * vmem_cap)

    def footprint(bt):
        acts = 2 * bt * S_p * (3 * A_p * in_bytes + A_p * out_bytes)        # q,k,v,out (dbl-buf)
        weights = 2 * (4 * A_p * D_p) * in_bytes + 2 * (3 * D_p + A_p) * 4  # w's + biases
        inter = bt * S_p * (
            4 * D_p * 4                      # qp, kp, vp, att (f32)
            + 3 * D_p * in_bytes             # compute-dtype copies of qp3/kp3/vp3
            + S_p * (4 + in_bytes)           # scores f32 + compute-dtype copy
            + A_p * 4)                       # pre-store output (f32)
        return acts + weights + inter

    # --- batch tile selection ----------------------------------------------------
    if block_b is None:
        rows_target = 1024 if vmem_cap >= (100 << 20) else 512   # fill MXU M dim
        block_b = max(1, rows_target // S_p)
        if B >= 2:
            # Keep >= 2 grid steps so "parallel" can shard across v7x's 2 TCs.
            block_b = min(block_b, -(-B // 2))
        block_b = min(block_b, B)
        while block_b > 1 and footprint(block_b) > vmem_budget:
            block_b -= 1
    block_b = max(1, min(block_b, B))
    B_p = _round_up(B, block_b)

    def pad_act(x):
        return jnp.pad(x, ((0, B_p - B), (0, S_p - S), (0, A_p - A))).astype(cdt_np)

    q_p, k_p, v_p = pad_act(q), pad_act(k), pad_act(v)

    act_spec = pl.BlockSpec((block_b, S_p, A_p), lambda b: (b, 0, 0))
    out_spec = pl.BlockSpec((block_b, S_p, A_p), lambda b: (b, 0, 0))

    def full_spec(shape):
        # grid-invariant block: same index every step -> fetched once, reused
        return pl.BlockSpec(shape, lambda b, _shape=shape: (0,) * len(_shape))

    kernel = partial(
        _self_attention_kernel,
        # module uses self.d_k = amp_dim (not att_dim); kept to match the spec.
        inv_sqrt_dk=1.0 / math.sqrt(amp_dim),
        seq_len=S,
        compute_dtype=cdt_np,
    )

    out_p = pl.pallas_call(
        kernel,
        out_shape=jax.ShapeDtypeStruct((B_p, S_p, A_p), out_np),
        grid_spec=pltpu.PrefetchScalarGridSpec(
            num_scalar_prefetch=0,
            grid=(B_p // block_b,),
            in_specs=[
                act_spec, act_spec, act_spec,                 # q, k, v
                full_spec((A_p, D_p)), full_spec((1, D_p)),   # wq, bq
                full_spec((A_p, D_p)), full_spec((1, D_p)),   # wk, bk
                full_spec((A_p, D_p)), full_spec((1, D_p)),   # wv, bv
                full_spec((D_p, A_p)), full_spec((1, A_p)),   # wo, bo
            ],
            out_specs=out_spec,
        ),
        compiler_params=pltpu.CompilerParams(
            dimension_semantics=("parallel",),
            vmem_limit_bytes=vmem_budget),
    )(q_p, k_p, v_p, wq_p, bq_p, wk_p, bk_p, wv_p, bv_p, wo_p, bo_p)

    return out_p[:B, :S, :A]


def init_params(key, amp_dim, att_dim, dtype=jnp.float32):
    ks = jax.random.split(key, 8)
    scale_in = 1.0 / math.sqrt(amp_dim)
    scale_att = 1.0 / math.sqrt(att_dim)
    # Weights stored as (in_features, out_features).
    wq = jax.random.uniform(ks[0], (amp_dim, att_dim), dtype, -scale_in, scale_in)
    bq = jax.random.uniform(ks[1], (1, att_dim), dtype, -scale_in, scale_in)
    wk = jax.random.uniform(ks[2], (amp_dim, att_dim), dtype, -scale_in, scale_in)
    bk = jax.random.uniform(ks[3], (1, att_dim), dtype, -scale_in, scale_in)
    wv = jax.random.uniform(ks[4], (amp_dim, att_dim), dtype, -scale_in, scale_in)
    bv = jax.random.uniform(ks[5], (1, att_dim), dtype, -scale_in, scale_in)
    wo = jax.random.uniform(ks[6], (att_dim, amp_dim), dtype, -scale_att, scale_att)
    bo = jax.random.uniform(ks[7], (1, amp_dim), dtype, -scale_att, scale_att)
    return (wq, bq, wk, bk, wv, bv, wo, bo)


def reference(q, k, v, params, amp_dim):
    """Pure-JAX reference matching the PyTorch forward."""
    wq, bq, wk, bk, wv, bv, wo, bo = params
    qp = q @ wq + bq
    kp = k @ wk + bk
    vp = v @ wv + bv
    scores = jax.nn.sigmoid((qp @ jnp.swapaxes(kp, -2, -1)) / math.sqrt(amp_dim))
    return (scores @ vp) @ wo + bo


if __name__ == "__main__":
    key = jax.random.PRNGKey(0)

    # --- case 1: lane-aligned feature dims --------------------------------------
    B, S, amp_dim, att_dim = 2, 8, 128, 128
    kq, kk, kv, kp = jax.random.split(key, 4)
    q = jax.random.normal(kq, (B, S, amp_dim), jnp.float32)
    k = jax.random.normal(kk, (B, S, amp_dim), jnp.float32)
    v = jax.random.normal(kv, (B, S, amp_dim), jnp.float32)
    params = init_params(kp, amp_dim, att_dim)
    ref = reference(q, k, v, params, amp_dim)

    # f32 operands, block_b=1 exercises a multi-step pipelined grid; tight check.
    out_f32 = jax.block_until_ready(
        self_attention_layer(q, k, v, params, amp_dim,
                             block_b=1, compute_dtype=jnp.float32))
    assert out_f32.shape == (B, S, amp_dim)
    assert jnp.allclose(out_f32, ref, atol=1e-4, rtol=1e-4), \
        f"f32 max abs err {jnp.max(jnp.abs(out_f32 - ref))}"

    # default path: bf16 operands pre-cast in HBM, auto batch tile; loose check.
    out_bf16 = jax.block_until_ready(self_attention_layer(q, k, v, params, amp_dim))
    assert jnp.allclose(out_bf16, ref, atol=5e-2, rtol=5e-2), \
        f"bf16 max abs err {jnp.max(jnp.abs(out_bf16 - ref))}"

    # --- case 2: unaligned dims (feature/seq/batch padding + padded-KV zeroing) --
    B2, S2, amp2, att2 = 3, 5, 33, 17
    k2a, k2b, k2c, k2d = jax.random.split(jax.random.PRNGKey(1), 4)
    q2 = jax.random.normal(k2a, (B2, S2, amp2), jnp.float32)
    k2 = jax.random.normal(k2b, (B2, S2, amp2), jnp.float32)
    v2 = jax.random.normal(k2c, (B2, S2, amp2), jnp.float32)
    params2 = init_params(k2d, amp2, att2)
    ref2 = reference(q2, k2, v2, params2, amp2)

    out2 = jax.block_until_ready(
        self_attention_layer(q2, k2, v2, params2, amp2,
                             block_b=2, compute_dtype=jnp.float32))
    assert out2.shape == (B2, S2, amp2)
    assert jnp.allclose(out2, ref2, atol=1e-4, rtol=1e-4), \
        f"padded-path max abs err {jnp.max(jnp.abs(out2 - ref2))}"

    print("KERNEL_OK")
</pallas_src>

<mosaic_0001>
module attributes {stable_mosaic.version = 11 : i64} {
  func.func @_self_attention_kernel(%arg0: i32, %arg1: memref<1x8x128xf32, #tpu.memory_space<vmem>>, %arg2: memref<1x8x128xf32, #tpu.memory_space<vmem>>, %arg3: memref<1x8x128xf32, #tpu.memory_space<vmem>>, %arg4: memref<128x128xf32, #tpu.memory_space<vmem>>, %arg5: memref<1x128xf32, #tpu.memory_space<vmem>>, %arg6: memref<128x128xf32, #tpu.memory_space<vmem>>, %arg7: memref<1x128xf32, #tpu.memory_space<vmem>>, %arg8: memref<128x128xf32, #tpu.memory_space<vmem>>, %arg9: memref<1x128xf32, #tpu.memory_space<vmem>>, %arg10: memref<128x128xf32, #tpu.memory_space<vmem>>, %arg11: memref<1x128xf32, #tpu.memory_space<vmem>>, %arg12: memref<1x8x128xf32, #tpu.memory_space<vmem>>) attributes {dimension_semantics = [#tpu.dimension_semantics<parallel>], iteration_bounds = array<i64: 2>, scalar_prefetch = 0 : i64, scratch_operands = 0 : i64, tpu.core_type = #tpu.core_type<tc>, window_params = [{transform_indices = @transform_0, window_bounds = array<i64: 1, 8, 128>}, {transform_indices = @transform_1, window_bounds = array<i64: 1, 8, 128>}, {transform_indices = @transform_2, window_bounds = array<i64: 1, 8, 128>}, {pipeline_mode = #tpu.pipeline_mode<synchronous>, transform_indices = @transform_3, window_bounds = array<i64: 128, 128>}, {pipeline_mode = #tpu.pipeline_mode<synchronous>, transform_indices = @transform_4, window_bounds = array<i64: 1, 128>}, {pipeline_mode = #tpu.pipeline_mode<synchronous>, transform_indices = @transform_5, window_bounds = array<i64: 128, 128>}, {pipeline_mode = #tpu.pipeline_mode<synchronous>, transform_indices = @transform_6, window_bounds = array<i64: 1, 128>}, {pipeline_mode = #tpu.pipeline_mode<synchronous>, transform_indices = @transform_7, window_bounds = array<i64: 128, 128>}, {pipeline_mode = #tpu.pipeline_mode<synchronous>, transform_indices = @transform_8, window_bounds = array<i64: 1, 128>}, {pipeline_mode = #tpu.pipeline_mode<synchronous>, transform_indices = @transform_9, window_bounds = array<i64: 128, 128>}, {pipeline_mode = #tpu.pipeline_mode<synchronous>, transform_indices = @transform_10, window_bounds = array<i64: 1, 128>}, {transform_indices = @transform_11, window_bounds = array<i64: 1, 8, 128>}]} {
    %c0 = arith.constant 0 : index
    %c0_0 = arith.constant 0 : index
    %c0_1 = arith.constant 0 : index
    %0 = vector.load %arg1[%c0, %c0_0, %c0_1] : memref<1x8x128xf32, #tpu.memory_space<vmem>>, vector<1x8x128xf32>
    %1 = vector.shape_cast %0 : vector<1x8x128xf32> to vector<8x128xf32>
    %c0_2 = arith.constant 0 : index
    %c0_3 = arith.constant 0 : index
    %c0_4 = arith.constant 0 : index
    %2 = vector.load %arg2[%c0_2, %c0_3, %c0_4] : memref<1x8x128xf32, #tpu.memory_space<vmem>>, vector<1x8x128xf32>
    %3 = vector.shape_cast %2 : vector<1x8x128xf32> to vector<8x128xf32>
    %c0_5 = arith.constant 0 : index
    %c0_6 = arith.constant 0 : index
    %c0_7 = arith.constant 0 : index
    %4 = vector.load %arg3[%c0_5, %c0_6, %c0_7] : memref<1x8x128xf32, #tpu.memory_space<vmem>>, vector<1x8x128xf32>
    %5 = vector.shape_cast %4 : vector<1x8x128xf32> to vector<8x128xf32>
    %c0_8 = arith.constant 0 : index
    %c0_9 = arith.constant 0 : index
    %6 = vector.load %arg4[%c0_8, %c0_9] : memref<128x128xf32, #tpu.memory_space<vmem>>, vector<128x128xf32>
    %c0_10 = arith.constant 0 : index
    %c0_11 = arith.constant 0 : index
    %7 = vector.load %arg6[%c0_10, %c0_11] : memref<128x128xf32, #tpu.memory_space<vmem>>, vector<128x128xf32>
    %c0_12 = arith.constant 0 : index
    %c0_13 = arith.constant 0 : index
    %8 = vector.load %arg8[%c0_12, %c0_13] : memref<128x128xf32, #tpu.memory_space<vmem>>, vector<128x128xf32>
    %c0_14 = arith.constant 0 : index
    %c0_15 = arith.constant 0 : index
    %9 = vector.load %arg10[%c0_14, %c0_15] : memref<128x128xf32, #tpu.memory_space<vmem>>, vector<128x128xf32>
    %cst = arith.constant dense<0.000000e+00> : vector<8x128xf32>
    %10 = tpu.matmul %1, %6, %cst {dimension_numbers = #tpu.dot_dimension_numbers<[1], [0], [0], [1], [0, 0, 1, 1], [], []>} : vector<8x128xf32>, vector<128x128xf32>, vector<8x128xf32> -> vector<8x128xf32>
    %c0_16 = arith.constant 0 : index
    %c0_17 = arith.constant 0 : index
    %11 = vector.load %arg5[%c0_16, %c0_17] : memref<1x128xf32, #tpu.memory_space<vmem>>, vector<1x128xf32>
    %12 = vector.broadcast %11 : vector<1x128xf32> to vector<8x128xf32>
    %13 = arith.addf %10, %12 : vector<8x128xf32>
    %cst_18 = arith.constant 0.0883883461 : f32
    %14 = vector.broadcast %cst_18 : f32 to vector<8x128xf32>
    %15 = arith.mulf %13, %14 : vector<8x128xf32>
    %cst_19 = arith.constant dense<0.000000e+00> : vector<8x128xf32>
    %16 = tpu.matmul %3, %7, %cst_19 {dimension_numbers = #tpu.dot_dimension_numbers<[1], [0], [0], [1], [0, 0, 1, 1], [], []>} : vector<8x128xf32>, vector<128x128xf32>, vector<8x128xf32> -> vector<8x128xf32>
    %c0_20 = arith.constant 0 : index
    %c0_21 = arith.constant 0 : index
    %17 = vector.load %arg7[%c0_20, %c0_21] : memref<1x128xf32, #tpu.memory_space<vmem>>, vector<1x128xf32>
    %18 = vector.broadcast %17 : vector<1x128xf32> to vector<8x128xf32>
    %19 = arith.addf %16, %18 : vector<8x128xf32>
    %cst_22 = arith.constant dense<0.000000e+00> : vector<8x128xf32>
    %20 = tpu.matmul %5, %8, %cst_22 {dimension_numbers = #tpu.dot_dimension_numbers<[1], [0], [0], [1], [0, 0, 1, 1], [], []>} : vector<8x128xf32>, vector<128x128xf32>, vector<8x128xf32> -> vector<8x128xf32>
    %c0_23 = arith.constant 0 : index
    %c0_24 = arith.constant 0 : index
    %21 = vector.load %arg9[%c0_23, %c0_24] : memref<1x128xf32, #tpu.memory_space<vmem>>, vector<1x128xf32>
    %22 = vector.broadcast %21 : vector<1x128xf32> to vector<8x128xf32>
    %23 = arith.addf %20, %22 : vector<8x128xf32>
    %24 = vector.shape_cast %15 : vector<8x128xf32> to vector<1x8x128xf32>
    %25 = vector.shape_cast %19 : vector<8x128xf32> to vector<1x8x128xf32>
    %26 = vector.shape_cast %23 : vector<8x128xf32> to vector<1x8x128xf32>
    %cst_25 = arith.constant dense<0.000000e+00> : vector<1x8x8xf32>
    %27 = tpu.matmul %24, %25, %cst_25 {dimension_numbers = #tpu.dot_dimension_numbers<[2], [2], [1], [1], [0, 0, 0, 1, 1, 1], [0], [0]>} : vector<1x8x128xf32>, vector<1x8x128xf32>, vector<1x8x8xf32> -> vector<1x8x8xf32>
    %28 = arith.negf %27 : vector<1x8x8xf32>
    %29 = math.exp %28 : vector<1x8x8xf32>
    %cst_26 = arith.constant 1.000000e+00 : f32
    %30 = vector.broadcast %cst_26 : f32 to vector<1x8x8xf32>
    %31 = arith.addf %30, %29 : vector<1x8x8xf32>
    %32 = arith.divf %30, %31 : vector<1x8x8xf32>
    %cst_27 = arith.constant dense<0.000000e+00> : vector<1x8x128xf32>
    %33 = tpu.matmul %32, %26, %cst_27 {dimension_numbers = #tpu.dot_dimension_numbers<[2], [1], [1], [2], [0, 0, 0, 1, 1, 2], [0], [0]>} : vector<1x8x8xf32>, vector<1x8x128xf32>, vector<1x8x128xf32> -> vector<1x8x128xf32>
    %34 = vector.shape_cast %33 : vector<1x8x128xf32> to vector<8x128xf32>
    %cst_28 = arith.constant dense<0.000000e+00> : vector<8x128xf32>
    %35 = tpu.matmul %34, %9, %cst_28 {dimension_numbers = #tpu.dot_dimension_numbers<[1], [0], [0], [1], [0, 0, 1, 1], [], []>} : vector<8x128xf32>, vector<128x128xf32>, vector<8x128xf32> -> vector<8x128xf32>
    %c0_29 = arith.constant 0 : index
    %c0_30 = arith.constant 0 : index
    %36 = vector.load %arg11[%c0_29, %c0_30] : memref<1x128xf32, #tpu.memory_space<vmem>>, vector<1x128xf32>
    %37 = vector.broadcast %36 : vector<1x128xf32> to vector<8x128xf32>
    %38 = arith.addf %35, %37 : vector<8x128xf32>
    %39 = vector.shape_cast %38 : vector<8x128xf32> to vector<1x8x128xf32>
    %c0_31 = arith.constant 0 : index
    %c0_32 = arith.constant 0 : index
    %c0_33 = arith.constant 0 : index
    %40 = vector.load %arg12[%c0_31, %c0_32, %c0_33] : memref<1x8x128xf32, #tpu.memory_space<vmem>>, vector<1x8x128xf32>
    tpu.vector_store %arg12[%c0_31, %c0_32, %c0_33], %39 {strides = array<i32>} : memref<1x8x128xf32, #tpu.memory_space<vmem>>, vector<1x8x128xf32>,
    return
  }
  func.func @transform_0(%arg0: i32) -> (i32, i32, i32) {
    %c0_i32 = arith.constant 0 : i32
    %c0_i32_0 = arith.constant 0 : i32
    %c0_i32_1 = arith.constant 0 : i32
    return %arg0, %c0_i32, %c0_i32_0 : i32, i32, i32
  }
  func.func @transform_1(%arg0: i32) -> (i32, i32, i32) {
    %c0_i32 = arith.constant 0 : i32
    %c0_i32_0 = arith.constant 0 : i32
    %c0_i32_1 = arith.constant 0 : i32
    return %arg0, %c0_i32, %c0_i32_0 : i32, i32, i32
  }
  func.func @transform_2(%arg0: i32) -> (i32, i32, i32) {
    %c0_i32 = arith.constant 0 : i32
    %c0_i32_0 = arith.constant 0 : i32
    %c0_i32_1 = arith.constant 0 : i32
    return %arg0, %c0_i32, %c0_i32_0 : i32, i32, i32
  }
  func.func @transform_3(%arg0: i32) -> (i32, i32) {
    %c0_i32 = arith.constant 0 : i32
    %c0_i32_0 = arith.constant 0 : i32
    %c0_i32_1 = arith.constant 0 : i32
    return %c0_i32, %c0_i32_0 : i32, i32
  }
  func.func @transform_4(%arg0: i32) -> (i32, i32) {
    %c0_i32 = arith.constant 0 : i32
    %c0_i32_0 = arith.constant 0 : i32
    %c0_i32_1 = arith.constant 0 : i32
    return %c0_i32, %c0_i32_0 : i32, i32
  }
  func.func @transform_5(%arg0: i32) -> (i32, i32) {
    %c0_i32 = arith.constant 0 : i32
    %c0_i32_0 = arith.constant 0 : i32
    %c0_i32_1 = arith.constant 0 : i32
    return %c0_i32, %c0_i32_0 : i32, i32
  }
  func.func @transform_6(%arg0: i32) -> (i32, i32) {
    %c0_i32 = arith.constant 0 : i32
    %c0_i32_0 = arith.constant 0 : i32
    %c0_i32_1 = arith.constant 0 : i32
    return %c0_i32, %c0_i32_0 : i32, i32
  }
  func.func @transform_7(%arg0: i32) -> (i32, i32) {
    %c0_i32 = arith.constant 0 : i32
    %c0_i32_0 = arith.constant 0 : i32
    %c0_i32_1 = arith.constant 0 : i32
    return %c0_i32, %c0_i32_0 : i32, i32
  }
  func.func @transform_8(%arg0: i32) -> (i32, i32) {
    %c0_i32 = arith.constant 0 : i32
    %c0_i32_0 = arith.constant 0 : i32
    %c0_i32_1 = arith.constant 0 : i32
    return %c0_i32, %c0_i32_0 : i32, i32
  }
  func.func @transform_9(%arg0: i32) -> (i32, i32) {
    %c0_i32 = arith.constant 0 : i32
    %c0_i32_0 = arith.constant 0 : i32
    %c0_i32_1 = arith.constant 0 : i32
    return %c0_i32, %c0_i32_0 : i32, i32
  }
  func.func @transform_10(%arg0: i32) -> (i32, i32) {
    %c0_i32 = arith.constant 0 : i32
    %c0_i32_0 = arith.constant 0 : i32
    %c0_i32_1 = arith.constant 0 : i32
    return %c0_i32, %c0_i32_0 : i32, i32
  }
  func.func @transform_11(%arg0: i32) -> (i32, i32, i32) {
    %c0_i32 = arith.constant 0 : i32
    %c0_i32_0 = arith.constant 0 : i32
    %c0_i32_1 = arith.constant 0 : i32
    return %arg0, %c0_i32, %c0_i32_0 : i32, i32, i32
  }
}

</mosaic_0001>

<llo_original>
// kernel: tpu_custom_call.1
$region0: #{tpu_custom_call.1}
  #allocation0 [shape = 'u32[]', space=smem, size = 0x4, offset = 0x4, fixed_abs, tag = 'smem constant byte address 0x4 - core index']
  #allocation1 [shape = 'u32[144,128]{1,0:T(1,128)}', space=vmem, size = 0x12000, scoped, tag = 'internal scratch']
  %s0 = inlined_call_operand.hbm [shape: f32[2,8,128], index: 0, kind: input, shape index: {}]
  %s1 = inlined_call_operand.hbm [shape: f32[2,8,128], index: 1, kind: input, shape index: {}]
  %s2 = inlined_call_operand.hbm [shape: f32[2,8,128], index: 2, kind: input, shape index: {}]
  %s3 = inlined_call_operand.hbm [shape: f32[128,128], index: 3, kind: input, shape index: {}]
  %s4 = inlined_call_operand.vmem [shape: f32[1,128], index: 4, kind: input, shape index: {}]
  %s5 = inlined_call_operand.hbm [shape: f32[128,128], index: 5, kind: input, shape index: {}]
  %s6 = inlined_call_operand.vmem [shape: f32[1,128], index: 6, kind: input, shape index: {}]
  %s7 = inlined_call_operand.hbm [shape: f32[128,128], index: 7, kind: input, shape index: {}]
  %s8 = inlined_call_operand.vmem [shape: f32[1,128], index: 8, kind: input, shape index: {}]
  %s9 = inlined_call_operand.hbm [shape: f32[128,128], index: 9, kind: input, shape index: {}]
  %s10 = inlined_call_operand.vmem [shape: f32[1,128], index: 10, kind: input, shape index: {}]
  %s11 = inlined_call_operand.hbm [shape: f32[2,8,128], index: 11, kind: output, shape index: {}]
  %s12 = sld [smem:[#allocation0]]
  $region105: #{tpu_custom_call.1} parent=0
    _
  %s14 = ssub.s32 1, %s12
  %s15 = scalar_select 0, %s14, %s12
  $region1: #{tpu_custom_call.1} parent=0
    #allocation2 [shape = 'u8[8192]{0}', space=vmem, size = 0x2000, scoped, tag = 'input window, operand 0']
    #allocation3 [shape = 's32[2]{0}', space=sflag, size = 0x8, scoped, tag = 'scoped memory for tpu_custom_call.1']
    #allocation4 [shape = 's32[2]{0}', space=sflag, size = 0x8, scoped, tag = 'scoped memory for tpu_custom_call.1']
    #allocation5 [shape = 'u8[8192]{0}', space=vmem, size = 0x2000, scoped, tag = 'input window, operand 1']
    #allocation6 [shape = 's32[2]{0}', space=sflag, size = 0x8, scoped, tag = 'scoped memory for tpu_custom_call.1']
    #allocation7 [shape = 'u8[8192]{0}', space=vmem, size = 0x2000, scoped, tag = 'input window, operand 2']
    #allocation8 [shape = 'u8[65536]{0}', space=vmem, size = 0x10000, scoped, tag = 'input window, operand 3, single buffered']
    #allocation9 [shape = 's32[1]{0}', space=sflag, size = 0x4, scoped, tag = 'scoped memory for tpu_custom_call.1']
    #allocation10 [shape = 'u8[65536]{0}', space=vmem, size = 0x10000, scoped, tag = 'input window, operand 5, single buffered']
    #allocation11 [shape = 'u8[65536]{0}', space=vmem, size = 0x10000, scoped, tag = 'input window, operand 7, single buffered']
    #allocation12 [shape = 's32[1]{0}', space=sflag, size = 0x4, scoped, tag = 'scoped memory for tpu_custom_call.1']
    #allocation13 [shape = 'u8[65536]{0}', space=vmem, size = 0x10000, scoped, tag = 'input window, operand 9, single buffered']
    #allocation14 [shape = 'u8[8192]{0}', space=vmem, size = 0x2000, scoped, tag = 'output window, operand 0']
    %16 = vsyncpa [#allocation3], 0
    %s17 = scalar_lea.sflag [#allocation3], 1
    %18 = vsyncpa %s17, 0
    %19 = vsyncpa [#allocation6], 0
    %s20 = scalar_lea.sflag [#allocation6], 1
    %21 = vsyncpa %s20, 0
    %22 = vsyncpa [#allocation9], 0
    %23 = vsyncpa [#allocation12], 0
    %24 = vsyncpa [#allocation4], 0
    %s25 = scalar_lea.sflag [#allocation4], 1
    %26 = vsyncpa %s25, 0
    loop: start=0, step=1, limit=4
    $region2: #{tpu_custom_call.1} parent=1 // loop_pre_header
      _
    $region3: #{tpu_custom_call.1} parent=1 // loop_header
      %s28 = sphi 0, %s32
      %p29 = scmp.ge.s32.totalorder %s28, 4
      %s38 = sphi 0, %s40
      %s41 = sphi 0, %s38
      %s42 = sphi 0, %s41
      %s58 = sphi 0, %s42
      %s64 = sphi 0, %s66
      %s67 = sphi 0, %s64
      %s68 = sphi 0, %s67
      %s84 = sphi 0, %s68
      %s90 = sphi 0, %s92
      %s93 = sphi 0, %s90
      %s94 = sphi 0, %s93
      %s110 = sphi 0, %s94
      %s114 = sphi 0, %s114
      %s116 = sphi 0, %s114
      %s117 = sphi 0, %s116
      %s131 = sphi 0, %s117
      %s135 = sphi 0, %s135
      %s137 = sphi 0, %s135
      %s138 = sphi 0, %s137
      %s152 = sphi 0, %s138
      %s156 = sphi 0, %s156
      %s158 = sphi 0, %s156
      %s159 = sphi 0, %s158
      %s173 = sphi 0, %s159
      %s177 = sphi 0, %s177
      %s179 = sphi 0, %s177
      %s180 = sphi 0, %s179
      %s194 = sphi 0, %s180
      %s198 = sphi 0, %s198
      %s200 = sphi 0, %s198
      %s201 = sphi 0, %s200
      %s215 = sphi 0, %s201
      %s219 = sphi 0, %s219
      %s221 = sphi 0, %s219
      %s222 = sphi 0, %s221
      %s236 = sphi 0, %s222
      %s240 = sphi 0, %s240
      %s242 = sphi 0, %s240
      %s243 = sphi 0, %s242
      %s257 = sphi 0, %s243
      %s261 = sphi 0, %s261
      %s263 = sphi 0, %s261
      %s264 = sphi 0, %s263
      %s278 = sphi 0, %s264
      %s284 = sphi 0, %s286
      %s287 = sphi 0, %s284
      %s288 = sphi 0, %s287
      %s304 = sphi 0, %s288
    $region4: #{tpu_custom_call.1} parent=1 // loop_header_branch
      %31 = sbr.rel (%p29) target = $region8
    $region5: #{tpu_custom_call.1} parent=1 // loop_body
      %s33 = ssub.s32 %s28, 1
      %s34 = ssub.s32 %s28, 2
      %s35 = sadd.s32 %s28, 1
      %s36 = ssub.s32 %s28, %s35
      %p37 = scmp.eq.s32.totalorder %s36, 0
      %s39 = sadd.s32 %s38, 1
      %s40 = scalar_select %p37, %s38, %s39
      %p43 = pneg %p37
      %p44 = scmp.eq.s32.totalorder %s28, 1
      %p45 = por %p43, %p44
      %p46 = scmp.ne.s32.totalorder %s38, %s41
      %p47 = scmp.eq.s32.totalorder %s28, 0
      %p48 = por %p46, %p47
      %p49 = scmp.ne.s32.totalorder %s38, %s41
      %p50 = scmp.eq.s32.totalorder %s33, 1
      %p51 = por %p49, %p50
      %p52 = scmp.ne.s32.totalorder %s41, %s42
      %p53 = scmp.eq.s32.totalorder %s33, 0
      %p54 = por %p52, %p53
      %p55 = scmp.ne.s32.totalorder %s41, %s42
      %p56 = scmp.eq.s32.totalorder %s34, 1
      %p57 = por %p55, %p56
      %p59 = scmp.ne.s32.totalorder %s42, %s58
      %p60 = scmp.eq.s32.totalorder %s34, 0
      %p61 = por %p59, %p60
      %s62 = ssub.s32 %s28, %s35
      %p63 = scmp.eq.s32.totalorder %s62, 0
      %s65 = sadd.s32 %s64, 1
      %s66 = scalar_select %p63, %s64, %s65
      %p69 = pneg %p63
      %p70 = scmp.eq.s32.totalorder %s28, 1
      %p71 = por %p69, %p70
      %p72 = scmp.ne.s32.totalorder %s64, %s67
      %p73 = scmp.eq.s32.totalorder %s28, 0
      %p74 = por %p72, %p73
      %p75 = scmp.ne.s32.totalorder %s64, %s67
      %p76 = scmp.eq.s32.totalorder %s33, 1
      %p77 = por %p75, %p76
      %p78 = scmp.ne.s32.totalorder %s67, %s68
      %p79 = scmp.eq.s32.totalorder %s33, 0
      %p80 = por %p78, %p79
      %p81 = scmp.ne.s32.totalorder %s67, %s68
      %p82 = scmp.eq.s32.totalorder %s34, 1
      %p83 = por %p81, %p82
      %p85 = scmp.ne.s32.totalorder %s68, %s84
      %p86 = scmp.eq.s32.totalorder %s34, 0
      %p87 = por %p85, %p86
      %s88 = ssub.s32 %s28, %s35
      %p89 = scmp.eq.s32.totalorder %s88, 0
      %s91 = sadd.s32 %s90, 1
      %s92 = scalar_select %p89, %s90, %s91
      %p95 = pneg %p89
      %p96 = scmp.eq.s32.totalorder %s28, 1
      %p97 = por %p95, %p96
      %p98 = scmp.ne.s32.totalorder %s90, %s93
      %p99 = scmp.eq.s32.totalorder %s28, 0
      %p100 = por %p98, %p99
      %p101 = scmp.ne.s32.totalorder %s90, %s93
      %p102 = scmp.eq.s32.totalorder %s33, 1
      %p103 = por %p101, %p102
      %p104 = scmp.ne.s32.totalorder %s93, %s94
      %p105 = scmp.eq.s32.totalorder %s33, 0
      %p106 = por %p104, %p105
      %p107 = scmp.ne.s32.totalorder %s93, %s94
      %p108 = scmp.eq.s32.totalorder %s34, 1
      %p109 = por %p107, %p108
      %p111 = scmp.ne.s32.totalorder %s94, %s110
      %p112 = scmp.eq.s32.totalorder %s34, 0
      %p113 = por %p111, %p112
      %s115 = sadd.s32 %s114, 1
      %p118 = scmp.eq.s32.totalorder %s28, 1
      %p119 = scmp.ne.s32.totalorder %s114, %s116
      %p120 = scmp.eq.s32.totalorder %s28, 0
      %p121 = por %p119, %p120
      %p122 = scmp.ne.s32.totalorder %s114, %s116
      %p123 = scmp.eq.s32.totalorder %s33, 1
      %p124 = por %p122, %p123
      %p125 = scmp.ne.s32.totalorder %s116, %s117
      %p126 = scmp.eq.s32.totalorder %s33, 0
      %p127 = por %p125, %p126
      %p128 = scmp.ne.s32.totalorder %s116, %s117
      %p129 = scmp.eq.s32.totalorder %s34, 1
      %p130 = por %p128, %p129
      %p132 = scmp.ne.s32.totalorder %s117, %s131
      %p133 = scmp.eq.s32.totalorder %s34, 0
      %p134 = por %p132, %p133
      %s136 = sadd.s32 %s135, 1
      %p139 = scmp.eq.s32.totalorder %s28, 1
      %p140 = scmp.ne.s32.totalorder %s135, %s137
      %p141 = scmp.eq.s32.totalorder %s28, 0
      %p142 = por %p140, %p141
      %p143 = scmp.ne.s32.totalorder %s135, %s137
      %p144 = scmp.eq.s32.totalorder %s33, 1
      %p145 = por %p143, %p144
      %p146 = scmp.ne.s32.totalorder %s137, %s138
      %p147 = scmp.eq.s32.totalorder %s33, 0
      %p148 = por %p146, %p147
      %p149 = scmp.ne.s32.totalorder %s137, %s138
      %p150 = scmp.eq.s32.totalorder %s34, 1
      %p151 = por %p149, %p150
      %p153 = scmp.ne.s32.totalorder %s138, %s152
      %p154 = scmp.eq.s32.totalorder %s34, 0
      %p155 = por %p153, %p154
      %s157 = sadd.s32 %s156, 1
      %p160 = scmp.eq.s32.totalorder %s28, 1
      %p161 = scmp.ne.s32.totalorder %s156, %s158
      %p162 = scmp.eq.s32.totalorder %s28, 0
      %p163 = por %p161, %p162
      %p164 = scmp.ne.s32.totalorder %s156, %s158
      %p165 = scmp.eq.s32.totalorder %s33, 1
      %p166 = por %p164, %p165
      %p167 = scmp.ne.s32.totalorder %s158, %s159
      %p168 = scmp.eq.s32.totalorder %s33, 0
      %p169 = por %p167, %p168
      %p170 = scmp.ne.s32.totalorder %s158, %s159
      %p171 = scmp.eq.s32.totalorder %s34, 1
      %p172 = por %p170, %p171
      %p174 = scmp.ne.s32.totalorder %s159, %s173
      %p175 = scmp.eq.s32.totalorder %s34, 0
      %p176 = por %p174, %p175
      %s178 = sadd.s32 %s177, 1
      %p181 = scmp.eq.s32.totalorder %s28, 1
      %p182 = scmp.ne.s32.totalorder %s177, %s179
      %p183 = scmp.eq.s32.totalorder %s28, 0
      %p184 = por %p182, %p183
      %p185 = scmp.ne.s32.totalorder %s177, %s179
      %p186 = scmp.eq.s32.totalorder %s33, 1
      %p187 = por %p185, %p186
      %p188 = scmp.ne.s32.totalorder %s179, %s180
      %p189 = scmp.eq.s32.totalorder %s33, 0
      %p190 = por %p188, %p189
      %p191 = scmp.ne.s32.totalorder %s179, %s180
      %p192 = scmp.eq.s32.totalorder %s34, 1
      %p193 = por %p191, %p192
      %p195 = scmp.ne.s32.totalorder %s180, %s194
      %p196 = scmp.eq.s32.totalorder %s34, 0
      %p197 = por %p195, %p196
      %s199 = sadd.s32 %s198, 1
      %p202 = scmp.eq.s32.totalorder %s28, 1
      %p203 = scmp.ne.s32.totalorder %s198, %s200
      %p204 = scmp.eq.s32.totalorder %s28, 0
      %p205 = por %p203, %p204
      %p206 = scmp.ne.s32.totalorder %s198, %s200
      %p207 = scmp.eq.s32.totalorder %s33, 1
      %p208 = por %p206, %p207
      %p209 = scmp.ne.s32.totalorder %s200, %s201
      %p210 = scmp.eq.s32.totalorder %s33, 0
      %p211 = por %p209, %p210
      %p212 = scmp.ne.s32.totalorder %s200, %s201
      %p213 = scmp.eq.s32.totalorder %s34, 1
      %p214 = por %p212, %p213
      %p216 = scmp.ne.s32.totalorder %s201, %s215
      %p217 = scmp.eq.s32.totalorder %s34, 0
      %p218 = por %p216, %p217
      %s220 = sadd.s32 %s219, 1
      %p223 = scmp.eq.s32.totalorder %s28, 1
      %p224 = scmp.ne.s32.totalorder %s219, %s221
      %p225 = scmp.eq.s32.totalorder %s28, 0
      %p226 = por %p224, %p225
      %p227 = scmp.ne.s32.totalorder %s219, %s221
      %p228 = scmp.eq.s32.totalorder %s33, 1
      %p229 = por %p227, %p228
      %p230 = scmp.ne.s32.totalorder %s221, %s222
      %p231 = scmp.eq.s32.totalorder %s33, 0
      %p232 = por %p230, %p231
      %p233 = scmp.ne.s32.totalorder %s221, %s222
      %p234 = scmp.eq.s32.totalorder %s34, 1
      %p235 = por %p233, %p234
      %p237 = scmp.ne.s32.totalorder %s222, %s236
      %p238 = scmp.eq.s32.totalorder %s34, 0
      %p239 = por %p237, %p238
      %s241 = sadd.s32 %s240, 1
      %p244 = scmp.eq.s32.totalorder %s28, 1
      %p245 = scmp.ne.s32.totalorder %s240, %s242
      %p246 = scmp.eq.s32.totalorder %s28, 0
      %p247 = por %p245, %p246
      %p248 = scmp.ne.s32.totalorder %s240, %s242
      %p249 = scmp.eq.s32.totalorder %s33, 1
      %p250 = por %p248, %p249
      %p251 = scmp.ne.s32.totalorder %s242, %s243
      %p252 = scmp.eq.s32.totalorder %s33, 0
      %p253 = por %p251, %p252
      %p254 = scmp.ne.s32.totalorder %s242, %s243
      %p255 = scmp.eq.s32.totalorder %s34, 1
      %p256 = por %p254, %p255
      %p258 = scmp.ne.s32.totalorder %s243, %s257
      %p259 = scmp.eq.s32.totalorder %s34, 0
      %p260 = por %p258, %p259
      %s262 = sadd.s32 %s261, 1
      %p265 = scmp.eq.s32.totalorder %s28, 1
      %p266 = scmp.ne.s32.totalorder %s261, %s263
      %p267 = scmp.eq.s32.totalorder %s28, 0
      %p268 = por %p266, %p267
      %p269 = scmp.ne.s32.totalorder %s261, %s263
      %p270 = scmp.eq.s32.totalorder %s33, 1
      %p271 = por %p269, %p270
      %p272 = scmp.ne.s32.totalorder %s263, %s264
      %p273 = scmp.eq.s32.totalorder %s33, 0
      %p274 = por %p272, %p273
      %p275 = scmp.ne.s32.totalorder %s263, %s264
      %p276 = scmp.eq.s32.totalorder %s34, 1
      %p277 = por %p275, %p276
      %p279 = scmp.ne.s32.totalorder %s264, %s278
      %p280 = scmp.eq.s32.totalorder %s34, 0
      %p281 = por %p279, %p280
      %s282 = ssub.s32 %s28, %s35
      %p283 = scmp.eq.s32.totalorder %s282, 0
      %s285 = sadd.s32 %s284, 1
      %s286 = scalar_select %p283, %s284, %s285
      %p289 = pneg %p283
      %p290 = scmp.eq.s32.totalorder %s28, 1
      %p291 = por %p289, %p290
      %p292 = scmp.ne.s32.totalorder %s284, %s287
      %p293 = scmp.eq.s32.totalorder %s28, 0
      %p294 = por %p292, %p293
      %p295 = scmp.ne.s32.totalorder %s284, %s287
      %p296 = scmp.eq.s32.totalorder %s33, 1
      %p297 = por %p295, %p296
      %p298 = scmp.ne.s32.totalorder %s287, %s288
      %p299 = scmp.eq.s32.totalorder %s33, 0
      %p300 = por %p298, %p299
      %p301 = scmp.ne.s32.totalorder %s287, %s288
      %p302 = scmp.eq.s32.totalorder %s34, 1
      %p303 = por %p301, %p302
      %p305 = scmp.ne.s32.totalorder %s288, %s304
      %p306 = scmp.eq.s32.totalorder %s34, 0
      %p307 = por %p305, %p306
      %p308 = scmp.le.s32.totalorder 1, %s28
      %p309 = scmp.lt.s32.totalorder %s28, 3
      %p310 = pnand %p308, %p309
      %p311 = pneg %p310
      // Predicated region
      $region9: #{tpu_custom_call.1} parent=5 // pred_check
        _
      $region10: #{tpu_custom_call.1} parent=5 // pred_check_branch
        %313 = sbr.rel (%p310) target = $region12
      $region11: #{tpu_custom_call.1} parent=5 // pred_region
        %s314 = ssub.s32 %s28, 1
        // Predicated region
        $region13: #{tpu_custom_call.1} parent=11 // pred_check
          %p315 = pneg %p127
        $region14: #{tpu_custom_call.1} parent=11 // pred_check_branch
          %317 = sbr.rel (%p315) target = $region16
        $region15: #{tpu_custom_call.1} parent=11 // pred_region
          %s319 = ssub.s32 2048, 2048
          %320 = vsyncadd [#allocation9], %s319
          %s321 = sshll.u32 [#allocation8], 4
          %s322 = int_to_ptr.vmem [resolvable:$true] %s321
          %327 = dma.hbm_to_vmem [thread:$0]  %s3, 2048, %s322, [#allocation9], 128, 128, 8
        $region16: #{tpu_custom_call.1} parent=11 // pred_fallthru
          _
        // Predicated region
        $region17: #{tpu_custom_call.1} parent=11 // pred_check
          %p328 = pneg %p148
        $region18: #{tpu_custom_call.1} parent=11 // pred_check_branch
          %330 = sbr.rel (%p328) target = $region20
        $region19: #{tpu_custom_call.1} parent=11 // pred_region
          _
        $region20: #{tpu_custom_call.1} parent=11 // pred_fallthru
          _
        // Predicated region
        $region21: #{tpu_custom_call.1} parent=11 // pred_check
          %p331 = pneg %p169
        $region22: #{tpu_custom_call.1} parent=11 // pred_check_branch
          %333 = sbr.rel (%p331) target = $region24
        $region23: #{tpu_custom_call.1} parent=11 // pred_region
          %s335 = ssub.s32 2048, 2048
          %336 = vsyncadd [#allocation9], %s335
          %s337 = sshll.u32 [#allocation10], 4
          %s338 = int_to_ptr.vmem [resolvable:$true] %s337
          %343 = dma.hbm_to_vmem [thread:$0]  %s5, 2048, %s338, [#allocation9], 128, 128, 8
        $region24: #{tpu_custom_call.1} parent=11 // pred_fallthru
          _
        // Predicated region
        $region25: #{tpu_custom_call.1} parent=11 // pred_check
          %p344 = pneg %p190
        $region26: #{tpu_custom_call.1} parent=11 // pred_check_branch
          %346 = sbr.rel (%p344) target = $region28
        $region27: #{tpu_custom_call.1} parent=11 // pred_region
          _
        $region28: #{tpu_custom_call.1} parent=11 // pred_fallthru
          _
        // Predicated region
        $region29: #{tpu_custom_call.1} parent=11 // pred_check
          %p347 = pneg %p211
        $region30: #{tpu_custom_call.1} parent=11 // pred_check_branch
          %349 = sbr.rel (%p347) target = $region32
        $region31: #{tpu_custom_call.1} parent=11 // pred_region
          %s351 = ssub.s32 2048, 2048
          %352 = vsyncadd [#allocation12], %s351
          %s353 = sshll.u32 [#allocation11], 4
          %s354 = int_to_ptr.vmem [resolvable:$true] %s353
          %359 = dma.hbm_to_vmem [thread:$0]  %s7, 2048, %s354, [#allocation12], 128, 128, 8
        $region32: #{tpu_custom_call.1} parent=11 // pred_fallthru
          _
        // Predicated region
        $region33: #{tpu_custom_call.1} parent=11 // pred_check
          %p360 = pneg %p232
        $region34: #{tpu_custom_call.1} parent=11 // pred_check_branch
          %362 = sbr.rel (%p360) target = $region36
        $region35: #{tpu_custom_call.1} parent=11 // pred_region
          _
        $region36: #{tpu_custom_call.1} parent=11 // pred_fallthru
          _
        // Predicated region
        $region37: #{tpu_custom_call.1} parent=11 // pred_check
          %p363 = pneg %p253
        $region38: #{tpu_custom_call.1} parent=11 // pred_check_branch
          %365 = sbr.rel (%p363) target = $region40
        $region39: #{tpu_custom_call.1} parent=11 // pred_region
          %s367 = ssub.s32 2048, 2048
          %368 = vsyncadd [#allocation12], %s367
          %s369 = sshll.u32 [#allocation13], 4
          %s370 = int_to_ptr.vmem [resolvable:$true] %s369
          %375 = dma.hbm_to_vmem [thread:$0]  %s9, 2048, %s370, [#allocation12], 128, 128, 8
        $region40: #{tpu_custom_call.1} parent=11 // pred_fallthru
          _
        // Predicated region
        $region41: #{tpu_custom_call.1} parent=11 // pred_check
          %p376 = pneg %p274
        $region42: #{tpu_custom_call.1} parent=11 // pred_check_branch
          %378 = sbr.rel (%p376) target = $region44
        $region43: #{tpu_custom_call.1} parent=11 // pred_region
          _
        $region44: #{tpu_custom_call.1} parent=11 // pred_fallthru
          _
      $region12: #{tpu_custom_call.1} parent=5 // pred_fallthru
        _
      %p379 = scmp.lt.s32.totalorder %s28, 2
      // Predicated region
      $region45: #{tpu_custom_call.1} parent=5 // pred_check
        %p380 = pneg %p379
      $region46: #{tpu_custom_call.1} parent=5 // pred_check_branch
        %382 = sbr.rel (%p380) target = $region48
      $region47: #{tpu_custom_call.1} parent=5 // pred_region
        // Predicated region
        $region49: #{tpu_custom_call.1} parent=47 // pred_check
          %p383 = pneg %p48
        $region50: #{tpu_custom_call.1} parent=47 // pred_check_branch
          %385 = sbr.rel (%p383) target = $region52
        $region51: #{tpu_custom_call.1} parent=47 // pred_region
          %s386 = sand.u32 %s38, 1
          %s387 = scalar_lea.sflag [#allocation3], %s386
          %s388 = sand.u32 %s38, 1
          %s389 = smul.addr %s388, 8
          %s390 = scalar_lea.vmem [#allocation2], %s389
          %s392 = ssub.s32 128, 128
          %393 = vsyncadd %s387, %s392
          %s394 = smul.addr %s28, 128
          %s395 = scalar_lea.hbm %s0, %s394
          %s397 = sshll.u32 %s390, 4
          %s398 = int_to_ptr.vmem [resolvable:$true] %s397
          %400 = dma.hbm_to_vmem [thread:$0]  %s395, 128, %s398, %s387
        $region52: #{tpu_custom_call.1} parent=47 // pred_fallthru
          _
        // Predicated region
        $region53: #{tpu_custom_call.1} parent=47 // pred_check
          %p401 = pneg %p74
        $region54: #{tpu_custom_call.1} parent=47 // pred_check_branch
          %403 = sbr.rel (%p401) target = $region56
        $region55: #{tpu_custom_call.1} parent=47 // pred_region
          %s404 = sand.u32 %s28, 1
          %s405 = scalar_lea.sflag [#allocation6], %s404
          %s406 = sand.u32 %s64, 1
          %s407 = smul.addr %s406, 8
          %s408 = scalar_lea.vmem [#allocation5], %s407
          %s410 = ssub.s32 128, 128
          %411 = vsyncadd %s405, %s410
          %s412 = smul.addr %s28, 128
          %s413 = scalar_lea.hbm %s1, %s412
          %s415 = sshll.u32 %s408, 4
          %s416 = int_to_ptr.vmem [resolvable:$true] %s415
          %418 = dma.hbm_to_vmem [thread:$0]  %s413, 128, %s416, %s405
        $region56: #{tpu_custom_call.1} parent=47 // pred_fallthru
          _
        // Predicated region
        $region57: #{tpu_custom_call.1} parent=47 // pred_check
          %p419 = pneg %p100
        $region58: #{tpu_custom_call.1} parent=47 // pred_check_branch
          %421 = sbr.rel (%p419) target = $region60
        $region59: #{tpu_custom_call.1} parent=47 // pred_region
          %s422 = sand.u32 %s28, 1
          %s423 = scalar_lea.sflag [#allocation6], %s422
          %s424 = sand.u32 %s90, 1
          %s425 = smul.addr %s424, 8
          %s426 = scalar_lea.vmem [#allocation7], %s425
          %s428 = ssub.s32 128, 128
          %429 = vsyncadd %s423, %s428
          %s430 = smul.addr %s28, 128
          %s431 = scalar_lea.hbm %s2, %s430
          %s433 = sshll.u32 %s426, 4
          %s434 = int_to_ptr.vmem [resolvable:$true] %s433
          %436 = dma.hbm_to_vmem [thread:$0]  %s431, 128, %s434, %s423
        $region60: #{tpu_custom_call.1} parent=47 // pred_fallthru
          _
      $region48: #{tpu_custom_call.1} parent=5 // pred_fallthru
        _
      %p437 = scmp.le.s32.totalorder 1, %s28
      %p438 = scmp.lt.s32.totalorder %s28, 3
      %p439 = pnand %p437, %p438
      %p440 = pneg %p439
      // Predicated region
      $region61: #{tpu_custom_call.1} parent=5 // pred_check
        _
      $region62: #{tpu_custom_call.1} parent=5 // pred_check_branch
        %442 = sbr.rel (%p439) target = $region64
      $region63: #{tpu_custom_call.1} parent=5 // pred_region
        %s443 = ssub.s32 %s28, 1
        %s444 = sand.u32 %s41, 1
        %s445 = scalar_lea.sflag [#allocation3], %s444
        %s446 = sand.u32 %s41, 1
        %s447 = smul.addr %s446, 8
        %s448 = scalar_lea.vmem [#allocation2], %s447
        // Predicated region
        $region65: #{tpu_custom_call.1} parent=63 // pred_check
          %p449 = pneg %p54
        $region66: #{tpu_custom_call.1} parent=63 // pred_check_branch
          %451 = sbr.rel (%p449) target = $region68
        $region67: #{tpu_custom_call.1} parent=63 // pred_region
          %452 = dma.done %s445, 128
        $region68: #{tpu_custom_call.1} parent=63 // pred_fallthru
          _
        %s453 = sand.u32 %s33, 1
        %s454 = scalar_lea.sflag [#allocation6], %s453
        %s455 = sand.u32 %s67, 1
        %s456 = smul.addr %s455, 8
        %s457 = scalar_lea.vmem [#allocation5], %s456
        // Predicated region
        $region69: #{tpu_custom_call.1} parent=63 // pred_check
          %p458 = pneg %p80
        $region70: #{tpu_custom_call.1} parent=63 // pred_check_branch
          %460 = sbr.rel (%p458) target = $region72
        $region71: #{tpu_custom_call.1} parent=63 // pred_region
          %461 = dma.done %s454, 128
        $region72: #{tpu_custom_call.1} parent=63 // pred_fallthru
          _
        %s462 = sand.u32 %s33, 1
        %s463 = scalar_lea.sflag [#allocation6], %s462
        %s464 = sand.u32 %s93, 1
        %s465 = smul.addr %s464, 8
        %s466 = scalar_lea.vmem [#allocation7], %s465
        // Predicated region
        $region73: #{tpu_custom_call.1} parent=63 // pred_check
          %p467 = pneg %p106
        $region74: #{tpu_custom_call.1} parent=63 // pred_check_branch
          %469 = sbr.rel (%p467) target = $region76
        $region75: #{tpu_custom_call.1} parent=63 // pred_region
          %470 = dma.done %s463, 128
        $region76: #{tpu_custom_call.1} parent=63 // pred_fallthru
          _
        // Predicated region
        $region77: #{tpu_custom_call.1} parent=63 // pred_check
          %p471 = pneg %p127
        $region78: #{tpu_custom_call.1} parent=63 // pred_check_branch
          %473 = sbr.rel (%p471) target = $region80
        $region79: #{tpu_custom_call.1} parent=63 // pred_region
          %474 = dma.done [#allocation9], 2048
        $region80: #{tpu_custom_call.1} parent=63 // pred_fallthru
          _
        // Predicated region
        $region81: #{tpu_custom_call.1} parent=63 // pred_check
          %p475 = pneg %p169
        $region82: #{tpu_custom_call.1} parent=63 // pred_check_branch
          %477 = sbr.rel (%p475) target = $region84
        $region83: #{tpu_custom_call.1} parent=63 // pred_region
          %478 = dma.done [#allocation9], 2048
        $region84: #{tpu_custom_call.1} parent=63 // pred_fallthru
          _
        // Predicated region
        $region85: #{tpu_custom_call.1} parent=63 // pred_check
          %p479 = pneg %p211
        $region86: #{tpu_custom_call.1} parent=63 // pred_check_branch
          %481 = sbr.rel (%p479) target = $region88
        $region87: #{tpu_custom_call.1} parent=63 // pred_region
          %482 = dma.done [#allocation12], 2048
        $region88: #{tpu_custom_call.1} parent=63 // pred_fallthru
          _
        // Predicated region
        $region89: #{tpu_custom_call.1} parent=63 // pred_check
          %p483 = pneg %p253
        $region90: #{tpu_custom_call.1} parent=63 // pred_check_branch
          %485 = sbr.rel (%p483) target = $region92
        $region91: #{tpu_custom_call.1} parent=63 // pred_region
          %486 = dma.done [#allocation12], 2048
        $region92: #{tpu_custom_call.1} parent=63 // pred_fallthru
          _
        %s487 = sand.u32 %s41, 1
        %s488 = scalar_lea.sflag [#allocation3], %s487
        %s489 = sand.u32 %s41, 1
        %s490 = smul.addr %s489, 8
        %s491 = scalar_lea.vmem [#allocation2], %s490
        %p492 = pneg %p54
        %p493 = pneg %p51
        %s494 = sand.u32 %s33, 1
        %s495 = scalar_lea.sflag [#allocation6], %s494
        %s496 = sand.u32 %s67, 1
        %s497 = smul.addr %s496, 8
        %s498 = scalar_lea.vmem [#allocation5], %s497
        %p499 = pneg %p80
        %p500 = pneg %p77
        %s501 = sand.u32 %s33, 1
        %s502 = scalar_lea.sflag [#allocation6], %s501
        %s503 = sand.u32 %s93, 1
        %s504 = smul.addr %s503, 8
        %s505 = scalar_lea.vmem [#allocation7], %s504
        %p506 = pneg %p106
        %p507 = pneg %p103
        %p508 = pneg %p127
        %p509 = pneg %p124
        %p510 = pneg %p148
        %p511 = pneg %p145
        %p512 = pneg %p169
        %p513 = pneg %p166
        %p514 = pneg %p190
        %p515 = pneg %p187
        %p516 = pneg %p211
        %p517 = pneg %p208
        %p518 = pneg %p232
        %p519 = pneg %p229
        %p520 = pneg %p253
        %p521 = pneg %p250
        %p522 = pneg %p274
        %p523 = pneg %p271
        %p524 = pneg %p300
        %p525 = pneg %p297
        %s526 = sand.u32 %s287, 1
        %s527 = scalar_lea.sflag [#allocation4], %s526
        %s528 = sand.u32 %s287, 1
        %s529 = smul.addr %s528, 8
        %s530 = scalar_lea.vmem [#allocation14], %s529
        %v531 = vld [vmem:[%s448] sm:$0xff]
        %v532 = vld [vmem:[%s457] sm:$0xff]
        %v533 = vld [vmem:[%s466] sm:$0xff]
        %v534 = vld [vmem:[#allocation8] sm:$0xff]
        %v535 = vld [vmem:[#allocation8 + $0x8] sm:$0xff]
        %v536 = vld [vmem:[#allocation8 + $0x10] sm:$0xff]
        %v537 = vld [vmem:[#allocation8 + $0x18] sm:$0xff]
        %v538 = vld [vmem:[#allocation8 + $0x20] sm:$0xff]
        %v539 = vld [vmem:[#allocation8 + $0x28] sm:$0xff]
        %v540 = vld [vmem:[#allocation8 + $0x30] sm:$0xff]
        %v541 = vld [vmem:[#allocation8 + $0x38] sm:$0xff]
        %v542 = vld [vmem:[#allocation8 + $0x40] sm:$0xff]
        %v543 = vld [vmem:[#allocation8 + $0x48] sm:$0xff]
        %v544 = vld [vmem:[#allocation8 + $0x50] sm:$0xff]
        %v545 = vld [vmem:[#allocation8 + $0x58] sm:$0xff]
        %v546 = vld [vmem:[#allocation8 + $0x60] sm:$0xff]
        %v547 = vld [vmem:[#allocation8 + $0x68] sm:$0xff]
        %v548 = vld [vmem:[#allocation8 + $0x70] sm:$0xff]
        %v549 = vld [vmem:[#allocation8 + $0x78] sm:$0xff]
        %v550 = vld [vmem:[#allocation10] sm:$0xff]
        %v551 = vld [vmem:[#allocation10 + $0x8] sm:$0xff]
        %v552 = vld [vmem:[#allocation10 + $0x10] sm:$0xff]
        %v553 = vld [vmem:[#allocation10 + $0x18] sm:$0xff]
        %v554 = vld [vmem:[#allocation10 + $0x20] sm:$0xff]
        %v555 = vld [vmem:[#allocation10 + $0x28] sm:$0xff]
        %v556 = vld [vmem:[#allocation10 + $0x30] sm:$0xff]
        %v557 = vld [vmem:[#allocation10 + $0x38] sm:$0xff]
        %v558 = vld [vmem:[#allocation10 + $0x40] sm:$0xff]
        %v559 = vld [vmem:[#allocation10 + $0x48] sm:$0xff]
        %v560 = vld [vmem:[#allocation10 + $0x50] sm:$0xff]
        %v561 = vld [vmem:[#allocation10 + $0x58] sm:$0xff]
        %v562 = vld [vmem:[#allocation10 + $0x60] sm:$0xff]
        %v563 = vld [vmem:[#allocation10 + $0x68] sm:$0xff]
        %v564 = vld [vmem:[#allocation10 + $0x70] sm:$0xff]
        %v565 = vld [vmem:[#allocation10 + $0x78] sm:$0xff]
        %v566 = vld [vmem:[#allocation11] sm:$0xff]
        %v567 = vld [vmem:[#allocation11 + $0x8] sm:$0xff]
        %v568 = vld [vmem:[#allocation11 + $0x10] sm:$0xff]
        %v569 = vld [vmem:[#allocation11 + $0x18] sm:$0xff]
        %v570 = vld [vmem:[#allocation11 + $0x20] sm:$0xff]
        %v571 = vld [vmem:[#allocation11 + $0x28] sm:$0xff]
        %v572 = vld [vmem:[#allocation11 + $0x30] sm:$0xff]
        %v573 = vld [vmem:[#allocation11 + $0x38] sm:$0xff]
        %v574 = vld [vmem:[#allocation11 + $0x40] sm:$0xff]
        %v575 = vld [vmem:[#allocation11 + $0x48] sm:$0xff]
        %v576 = vld [vmem:[#allocation11 + $0x50] sm:$0xff]
        %v577 = vld [vmem:[#allocation11 + $0x58] sm:$0xff]
        %v578 = vld [vmem:[#allocation11 + $0x60] sm:$0xff]
        %v579 = vld [vmem:[#allocation11 + $0x68] sm:$0xff]
        %v580 = vld [vmem:[#allocation11 + $0x70] sm:$0xff]
        %v581 = vld [vmem:[#allocation11 + $0x78] sm:$0xff]
        %v582 = vld [vmem:[#allocation13] sm:$0xff]
        %v583 = vld [vmem:[#allocation13 + $0x8] sm:$0xff]
        %v584 = vld [vmem:[#allocation13 + $0x10] sm:$0xff]
        %v585 = vld [vmem:[#allocation13 + $0x18] sm:$0xff]
        %v586 = vld [vmem:[#allocation13 + $0x20] sm:$0xff]
        %v587 = vld [vmem:[#allocation13 + $0x28] sm:$0xff]
        %v588 = vld [vmem:[#allocation13 + $0x30] sm:$0xff]
        %v589 = vld [vmem:[#allocation13 + $0x38] sm:$0xff]
        %v590 = vld [vmem:[#allocation13 + $0x40] sm:$0xff]
        %v591 = vld [vmem:[#allocation13 + $0x48] sm:$0xff]
        %v592 = vld [vmem:[#allocation13 + $0x50] sm:$0xff]
        %v593 = vld [vmem:[#allocation13 + $0x58] sm:$0xff]
        %v594 = vld [vmem:[#allocation13 + $0x60] sm:$0xff]
        %v595 = vld [vmem:[#allocation13 + $0x68] sm:$0xff]
        %v596 = vld [vmem:[#allocation13 + $0x70] sm:$0xff]
        %v597 = vld [vmem:[#allocation13 + $0x78] sm:$0xff]
        %v598 = vld [vmem:[%s4] sm:$0x1]
        %v600 = vlaneseq
        %v601 = vshrl.u32 %v600, 7
        %v602 = vsub.s32 0, %v601
        %v603 = vrot.slane %v598, %v602
        %605 = vmatprep.subr.mxu0 0.0
        %606 = vmatpush1.msra.mxu0 %v534
        %607 = vmatprep.subr.mxu0 0.0
        %608 = vmatpush1.msra.mxu0 %v535
        %609 = vmatprep.subr.mxu0 0.0
        %610 = vmatpush1.msra.mxu0 %v536
        %611 = vmatprep.subr.mxu0 0.0
        %612 = vmatpush1.msra.mxu0 %v537
        %613 = vmatprep.subr.mxu0 0.0
        %614 = vmatpush1.msra.mxu0 %v538
        %615 = vmatprep.subr.mxu0 0.0
        %616 = vmatpush1.msra.mxu0 %v539
        %617 = vmatprep.subr.mxu0 0.0
        %618 = vmatpush1.msra.mxu0 %v540
        %619 = vmatprep.subr.mxu0 0.0
        %620 = vmatpush1.msra.mxu0 %v541
        %621 = vmatprep.subr.mxu0 0.0
        %622 = vmatpush1.msra.mxu0 %v542
        %623 = vmatprep.subr.mxu0 0.0
        %624 = vmatpush1.msra.mxu0 %v543
        %625 = vmatprep.subr.mxu0 0.0
        %626 = vmatpush1.msra.mxu0 %v544
        %627 = vmatprep.subr.mxu0 0.0
        %628 = vmatpush1.msra.mxu0 %v545
        %629 = vmatprep.subr.mxu0 0.0
        %630 = vmatpush1.msra.mxu0 %v546
        %631 = vmatprep.subr.mxu0 0.0
        %632 = vmatpush1.msra.mxu0 %v547
        %633 = vmatprep.subr.mxu0 0.0
        %634 = vmatpush1.msra.mxu0 %v548
        %635 = vmatprep.subr.mxu0 0.0
        %636 = vmatpush1.msra.mxu0 %v549
        %637 = vmatprep.subr.mxu0 0.0
        %638 = vmatpush1.msra.mxu0 0.0
        %639 = vmatprep.subr.mxu0 0.0
        %640 = vmatpush1.msra.mxu0 0.0
        %641 = vmatprep.subr.mxu0 0.0
        %642 = vmatpush1.msra.mxu0 0.0
        %643 = vmatprep.subr.mxu0 0.0
        %644 = vmatpush1.msra.mxu0 0.0
        %645 = vmatprep.subr.mxu0 0.0
        %646 = vmatpush1.msra.mxu0 0.0
        %647 = vmatprep.subr.mxu0 0.0
        %648 = vmatpush1.msra.mxu0 0.0
        %649 = vmatprep.subr.mxu0 0.0
        %650 = vmatpush1.msra.mxu0 0.0
        %651 = vmatprep.subr.mxu0 0.0
        %652 = vmatpush1.msra.mxu0 0.0
        %653 = vmatprep.subr.mxu0 0.0
        %654 = vmatpush1.msra.mxu0 0.0
        %655 = vmatprep.subr.mxu0 0.0
        %656 = vmatpush1.msra.mxu0 0.0
        %657 = vmatprep.subr.mxu0 0.0
        %658 = vmatpush1.msra.mxu0 0.0
        %659 = vmatprep.subr.mxu0 0.0
        %660 = vmatpush1.msra.mxu0 0.0
        %661 = vmatprep.subr.mxu0 0.0
        %662 = vmatpush1.msra.mxu0 0.0
        %663 = vmatprep.subr.mxu0 0.0
        %664 = vmatpush1.msra.mxu0 0.0
        %665 = vmatprep.subr.mxu0 0.0
        %666 = vmatpush1.msra.mxu0 0.0
        %667 = vmatprep.subr.mxu0 0.0
        %668 = vmatpush1.msra.mxu0 0.0
        %669 = vmatprep.mubr.f32.mxu0 0.0
        %670 = vmatmul.mubr.f32.gmra.mrb[0].mxu0 %v531
        %v671 = vpop.f32.mrb[0].mxu0
        %v672 = vadd.f32 %v603, %v671
        %v673 = vpop.f32.mrb[0].mxu0
        %674 = vdwg.mxu0
        %v675 = vmul.f32 %v672, 0.088388346
        %v676 = vld [vmem:[%s6] sm:$0x1]
        %v678 = vlaneseq
        %v679 = vshrl.u32 %v678, 7
        %v680 = vsub.s32 0, %v679
        %v681 = vrot.slane %v676, %v680
        %683 = vmatprep.subr.mxu0 0.0
        %684 = vmatpush1.msra.mxu0 %v550
        %685 = vmatprep.subr.mxu0 0.0
        %686 = vmatpush1.msra.mxu0 %v551
        %687 = vmatprep.subr.mxu0 0.0
        %688 = vmatpush1.msra.mxu0 %v552
        %689 = vmatprep.subr.mxu0 0.0
        %690 = vmatpush1.msra.mxu0 %v553
        %691 = vmatprep.subr.mxu0 0.0
        %692 = vmatpush1.msra.mxu0 %v554
        %693 = vmatprep.subr.mxu0 0.0
        %694 = vmatpush1.msra.mxu0 %v555
        %695 = vmatprep.subr.mxu0 0.0
        %696 = vmatpush1.msra.mxu0 %v556
        %697 = vmatprep.subr.mxu0 0.0
        %698 = vmatpush1.msra.mxu0 %v557
        %699 = vmatprep.subr.mxu0 0.0
        %700 = vmatpush1.msra.mxu0 %v558
        %701 = vmatprep.subr.mxu0 0.0
        %702 = vmatpush1.msra.mxu0 %v559
        %703 = vmatprep.subr.mxu0 0.0
        %704 = vmatpush1.msra.mxu0 %v560
        %705 = vmatprep.subr.mxu0 0.0
        %706 = vmatpush1.msra.mxu0 %v561
        %707 = vmatprep.subr.mxu0 0.0
        %708 = vmatpush1.msra.mxu0 %v562
        %709 = vmatprep.subr.mxu0 0.0
        %710 = vmatpush1.msra.mxu0 %v563
        %711 = vmatprep.subr.mxu0 0.0
        %712 = vmatpush1.msra.mxu0 %v564
        %713 = vmatprep.subr.mxu0 0.0
        %714 = vmatpush1.msra.mxu0 %v565
        %715 = vmatprep.subr.mxu0 0.0
        %716 = vmatpush1.msra.mxu0 0.0
        %717 = vmatprep.subr.mxu0 0.0
        %718 = vmatpush1.msra.mxu0 0.0
        %719 = vmatprep.subr.mxu0 0.0
        %720 = vmatpush1.msra.mxu0 0.0
        %721 = vmatprep.subr.mxu0 0.0
        %722 = vmatpush1.msra.mxu0 0.0
        %723 = vmatprep.subr.mxu0 0.0
        %724 = vmatpush1.msra.mxu0 0.0
        %725 = vmatprep.subr.mxu0 0.0
        %726 = vmatpush1.msra.mxu0 0.0
        %727 = vmatprep.subr.mxu0 0.0
        %728 = vmatpush1.msra.mxu0 0.0
        %729 = vmatprep.subr.mxu0 0.0
        %730 = vmatpush1.msra.mxu0 0.0
        %731 = vmatprep.subr.mxu0 0.0
        %732 = vmatpush1.msra.mxu0 0.0
        %733 = vmatprep.subr.mxu0 0.0
        %734 = vmatpush1.msra.mxu0 0.0
        %735 = vmatprep.subr.mxu0 0.0
        %736 = vmatpush1.msra.mxu0 0.0
        %737 = vmatprep.subr.mxu0 0.0
        %738 = vmatpush1.msra.mxu0 0.0
        %739 = vmatprep.subr.mxu0 0.0
        %740 = vmatpush1.msra.mxu0 0.0
        %741 = vmatprep.subr.mxu0 0.0
        %742 = vmatpush1.msra.mxu0 0.0
        %743 = vmatprep.subr.mxu0 0.0
        %744 = vmatpush1.msra.mxu0 0.0
        %745 = vmatprep.subr.mxu0 0.0
        %746 = vmatpush1.msra.mxu0 0.0
        %747 = vmatprep.mubr.f32.mxu0 0.0
        %748 = vmatmul.mubr.f32.gmra.mrb[0].mxu0 %v532
        %v749 = vpop.f32.mrb[0].mxu0
        %v750 = vadd.f32 %v681, %v749
        %v751 = vpop.f32.mrb[0].mxu0
        %752 = vdwg.mxu0
        %v753 = vld [vmem:[%s8] sm:$0x1]
        %v755 = vlaneseq
        %v756 = vshrl.u32 %v755, 7
        %v757 = vsub.s32 0, %v756
        %v758 = vrot.slane %v753, %v757
        %760 = vmatprep.subr.mxu0 0.0
        %761 = vmatpush1.msra.mxu0 %v566
        %762 = vmatprep.subr.mxu0 0.0
        %763 = vmatpush1.msra.mxu0 %v567
        %764 = vmatprep.subr.mxu0 0.0
        %765 = vmatpush1.msra.mxu0 %v568
        %766 = vmatprep.subr.mxu0 0.0
        %767 = vmatpush1.msra.mxu0 %v569
        %768 = vmatprep.subr.mxu0 0.0
        %769 = vmatpush1.msra.mxu0 %v570
        %770 = vmatprep.subr.mxu0 0.0
        %771 = vmatpush1.msra.mxu0 %v571
        %772 = vmatprep.subr.mxu0 0.0
        %773 = vmatpush1.msra.mxu0 %v572
        %774 = vmatprep.subr.mxu0 0.0
        %775 = vmatpush1.msra.mxu0 %v573
        %776 = vmatprep.subr.mxu0 0.0
        %777 = vmatpush1.msra.mxu0 %v574
        %778 = vmatprep.subr.mxu0 0.0
        %779 = vmatpush1.msra.mxu0 %v575
        %780 = vmatprep.subr.mxu0 0.0
        %781 = vmatpush1.msra.mxu0 %v576
        %782 = vmatprep.subr.mxu0 0.0
        %783 = vmatpush1.msra.mxu0 %v577
        %784 = vmatprep.subr.mxu0 0.0
        %785 = vmatpush1.msra.mxu0 %v578
        %786 = vmatprep.subr.mxu0 0.0
        %787 = vmatpush1.msra.mxu0 %v579
        %788 = vmatprep.subr.mxu0 0.0
        %789 = vmatpush1.msra.mxu0 %v580
        %790 = vmatprep.subr.mxu0 0.0
        %791 = vmatpush1.msra.mxu0 %v581
        %792 = vmatprep.subr.mxu0 0.0
        %793 = vmatpush1.msra.mxu0 0.0
        %794 = vmatprep.subr.mxu0 0.0
        %795 = vmatpush1.msra.mxu0 0.0
        %796 = vmatprep.subr.mxu0 0.0
        %797 = vmatpush1.msra.mxu0 0.0
        %798 = vmatprep.subr.mxu0 0.0
        %799 = vmatpush1.msra.mxu0 0.0
        %800 = vmatprep.subr.mxu0 0.0
        %801 = vmatpush1.msra.mxu0 0.0
        %802 = vmatprep.subr.mxu0 0.0
        %803 = vmatpush1.msra.mxu0 0.0
        %804 = vmatprep.subr.mxu0 0.0
        %805 = vmatpush1.msra.mxu0 0.0
        %806 = vmatprep.subr.mxu0 0.0
        %807 = vmatpush1.msra.mxu0 0.0
        %808 = vmatprep.subr.mxu0 0.0
        %809 = vmatpush1.msra.mxu0 0.0
        %810 = vmatprep.subr.mxu0 0.0
        %811 = vmatpush1.msra.mxu0 0.0
        %812 = vmatprep.subr.mxu0 0.0
        %813 = vmatpush1.msra.mxu0 0.0
        %814 = vmatprep.subr.mxu0 0.0
        %815 = vmatpush1.msra.mxu0 0.0
        %816 = vmatprep.subr.mxu0 0.0
        %817 = vmatpush1.msra.mxu0 0.0
        %818 = vmatprep.subr.mxu0 0.0
        %819 = vmatpush1.msra.mxu0 0.0
        %820 = vmatprep.subr.mxu0 0.0
        %821 = vmatpush1.msra.mxu0 0.0
        %822 = vmatprep.subr.mxu0 0.0
        %823 = vmatpush1.msra.mxu0 0.0
        %824 = vmatprep.mubr.f32.mxu0 0.0
        %825 = vmatmul.mubr.f32.gmra.mrb[0].mxu0 %v533
        %v826 = vpop.f32.mrb[0].mxu0
        %v827 = vadd.f32 %v758, %v826
        %v828 = vpop.f32.mrb[0].mxu0
        %829 = vdwg.mxu0
        %830 = vmatprep.subr.mxu0 0.0
        %831 = vmatpush1.xpose.msra.mxu0 %v750
        %832 = vmatprep.subr.mxu0 0.0
        %833 = vmatpush1.xpose.msra.mxu0 0.0
        %834 = vmatprep.subr.mxu0 0.0
        %835 = vmatpush1.xpose.msra.mxu0 0.0
        %836 = vmatprep.subr.mxu0 0.0
        %837 = vmatpush1.xpose.msra.mxu0 0.0
        %838 = vmatprep.subr.mxu0 0.0
        %839 = vmatpush1.xpose.msra.mxu0 0.0
        %840 = vmatprep.subr.mxu0 0.0
        %841 = vmatpush1.xpose.msra.mxu0 0.0
        %842 = vmatprep.subr.mxu0 0.0
        %843 = vmatpush1.xpose.msra.mxu0 0.0
        %844 = vmatprep.subr.mxu0 0.0
        %845 = vmatpush1.xpose.msra.mxu0 0.0
        %846 = vmatprep.subr.mxu0 0.0
        %847 = vmatpush1.xpose.msra.mxu0 0.0
        %848 = vmatprep.subr.mxu0 0.0
        %849 = vmatpush1.xpose.msra.mxu0 0.0
        %850 = vmatprep.subr.mxu0 0.0
        %851 = vmatpush1.xpose.msra.mxu0 0.0
        %852 = vmatprep.subr.mxu0 0.0
        %853 = vmatpush1.xpose.msra.mxu0 0.0
        %854 = vmatprep.subr.mxu0 0.0
        %855 = vmatpush1.xpose.msra.mxu0 0.0
        %856 = vmatprep.subr.mxu0 0.0
        %857 = vmatpush1.xpose.msra.mxu0 0.0
        %858 = vmatprep.subr.mxu0 0.0
        %859 = vmatpush1.xpose.msra.mxu0 0.0
        %860 = vmatprep.subr.mxu0 0.0
        %861 = vmatpush1.xpose.msra.mxu0 0.0
        %862 = vmatprep.subr.mxu0 0.0
        %863 = vmatpush1.xpose.msra.mxu0 0.0
        %864 = vmatprep.subr.mxu0 0.0
        %865 = vmatpush1.xpose.msra.mxu0 0.0
        %866 = vmatprep.subr.mxu0 0.0
        %867 = vmatpush1.xpose.msra.mxu0 0.0
        %868 = vmatprep.subr.mxu0 0.0
        %869 = vmatpush1.xpose.msra.mxu0 0.0
        %870 = vmatprep.subr.mxu0 0.0
        %871 = vmatpush1.xpose.msra.mxu0 0.0
        %872 = vmatprep.subr.mxu0 0.0
        %873 = vmatpush1.xpose.msra.mxu0 0.0
        %874 = vmatprep.subr.mxu0 0.0
        %875 = vmatpush1.xpose.msra.mxu0 0.0
        %876 = vmatprep.subr.mxu0 0.0
        %877 = vmatpush1.xpose.msra.mxu0 0.0
        %878 = vmatprep.subr.mxu0 0.0
        %879 = vmatpush1.xpose.msra.mxu0 0.0
        %880 = vmatprep.subr.mxu0 0.0
        %881 = vmatpush1.xpose.msra.mxu0 0.0
        %882 = vmatprep.subr.mxu0 0.0
        %883 = vmatpush1.xpose.msra.mxu0 0.0
        %884 = vmatprep.subr.mxu0 0.0
        %885 = vmatpush1.xpose.msra.mxu0 0.0
        %886 = vmatprep.subr.mxu0 0.0
        %887 = vmatpush1.xpose.msra.mxu0 0.0
        %888 = vmatprep.subr.mxu0 0.0
        %889 = vmatpush1.xpose.msra.mxu0 0.0
        %890 = vmatprep.subr.mxu0 0.0
        %891 = vmatpush1.xpose.msra.mxu0 0.0
        %892 = vmatprep.subr.mxu0 0.0
        %893 = vmatpush1.xpose.msra.mxu0 0.0
        %894 = vmatprep.mubr.f32.mxu0 0.0
        %895 = vmatmul.mubr.f32.gmra.mrb[0].mxu0 %v675
        %v896 = vpop.f32.mrb[0].mxu0
        %v897 = vadd.f32 0.0, %v896
        %v898 = vpop.f32.mrb[0].mxu0
        %899 = vdwg.mxu0
        %v900 = vxor.u32 %v897, 2147483648
        %v901 = vmul.f32 %v900, 1.442695
        %v902 = vpow.pop %v901
        %v903 = vadd.f32 %v902, 1.0
        %v904 = vrcp.pop %v903
        %v905 = vmul.f32 1.0, %v904
        %vm906 = vcmask 64512
        %v908 = vsel %vm906, %v905, 0
        %910 = vmatprep.subr.mxu0 0.0
        %911 = vmatpush1.msra.mxu0 %v827
        %912 = vmatprep.subr.mxu0 0.0
        %913 = vmatpush1.msra.mxu0 0.0
        %914 = vmatprep.subr.mxu0 0.0
        %915 = vmatpush1.msra.mxu0 0.0
        %916 = vmatprep.subr.mxu0 0.0
        %917 = vmatpush1.msra.mxu0 0.0
        %918 = vmatprep.subr.mxu0 0.0
        %919 = vmatpush1.msra.mxu0 0.0
        %920 = vmatprep.subr.mxu0 0.0
        %921 = vmatpush1.msra.mxu0 0.0
        %922 = vmatprep.subr.mxu0 0.0
        %923 = vmatpush1.msra.mxu0 0.0
        %924 = vmatprep.subr.mxu0 0.0
        %925 = vmatpush1.msra.mxu0 0.0
        %926 = vmatprep.subr.mxu0 0.0
        %927 = vmatpush1.msra.mxu0 0.0
        %928 = vmatprep.subr.mxu0 0.0
        %929 = vmatpush1.msra.mxu0 0.0
        %930 = vmatprep.subr.mxu0 0.0
        %931 = vmatpush1.msra.mxu0 0.0
        %932 = vmatprep.subr.mxu0 0.0
        %933 = vmatpush1.msra.mxu0 0.0
        %934 = vmatprep.subr.mxu0 0.0
        %935 = vmatpush1.msra.mxu0 0.0
        %936 = vmatprep.subr.mxu0 0.0
        %937 = vmatpush1.msra.mxu0 0.0
        %938 = vmatprep.subr.mxu0 0.0
        %939 = vmatpush1.msra.mxu0 0.0
        %940 = vmatprep.subr.mxu0 0.0
        %941 = vmatpush1.msra.mxu0 0.0
        %942 = vmatprep.subr.mxu0 0.0
        %943 = vmatpush1.msra.mxu0 0.0
        %944 = vmatprep.subr.mxu0 0.0
        %945 = vmatpush1.msra.mxu0 0.0
        %946 = vmatprep.subr.mxu0 0.0
        %947 = vmatpush1.msra.mxu0 0.0
        %948 = vmatprep.subr.mxu0 0.0
        %949 = vmatpush1.msra.mxu0 0.0
        %950 = vmatprep.subr.mxu0 0.0
        %951 = vmatpush1.msra.mxu0 0.0
        %952 = vmatprep.subr.mxu0 0.0
        %953 = vmatpush1.msra.mxu0 0.0
        %954 = vmatprep.subr.mxu0 0.0
        %955 = vmatpush1.msra.mxu0 0.0
        %956 = vmatprep.subr.mxu0 0.0
        %957 = vmatpush1.msra.mxu0 0.0
        %958 = vmatprep.subr.mxu0 0.0
        %959 = vmatpush1.msra.mxu0 0.0
        %960 = vmatprep.subr.mxu0 0.0
        %961 = vmatpush1.msra.mxu0 0.0
        %962 = vmatprep.subr.mxu0 0.0
        %963 = vmatpush1.msra.mxu0 0.0
        %964 = vmatprep.subr.mxu0 0.0
        %965 = vmatpush1.msra.mxu0 0.0
        %966 = vmatprep.subr.mxu0 0.0
        %967 = vmatpush1.msra.mxu0 0.0
        %968 = vmatprep.subr.mxu0 0.0
        %969 = vmatpush1.msra.mxu0 0.0
        %970 = vmatprep.subr.mxu0 0.0
        %971 = vmatpush1.msra.mxu0 0.0
        %972 = vmatprep.subr.mxu0 0.0
        %973 = vmatpush1.msra.mxu0 0.0
        %974 = vmatprep.mubr.f32.mxu0 0.0
        %975 = vmatmul.mubr.f32.gmra.mrb[0].mxu0 %v908
        %v976 = vpop.f32.mrb[0].mxu0
        %v977 = vadd.f32 0.0, %v976
        %v978 = vpop.f32.mrb[0].mxu0
        %979 = vdwg.mxu0
        %v980 = vld [vmem:[%s10] sm:$0x1]
        %v982 = vlaneseq
        %v983 = vshrl.u32 %v982, 7
        %v984 = vsub.s32 0, %v983
        %v985 = vrot.slane %v980, %v984
        %987 = vmatprep.subr.mxu0 0.0
        %988 = vmatpush1.msra.mxu0 %v582
        %989 = vmatprep.subr.mxu0 0.0
        %990 = vmatpush1.msra.mxu0 %v583
        %991 = vmatprep.subr.mxu0 0.0
        %992 = vmatpush1.msra.mxu0 %v584
        %993 = vmatprep.subr.mxu0 0.0
        %994 = vmatpush1.msra.mxu0 %v585
        %995 = vmatprep.subr.mxu0 0.0
        %996 = vmatpush1.msra.mxu0 %v586
        %997 = vmatprep.subr.mxu0 0.0
        %998 = vmatpush1.msra.mxu0 %v587
        %999 = vmatprep.subr.mxu0 0.0
        %1000 = vmatpush1.msra.mxu0 %v588
        %1001 = vmatprep.subr.mxu0 0.0
        %1002 = vmatpush1.msra.mxu0 %v589
        %1003 = vmatprep.subr.mxu0 0.0
        %1004 = vmatpush1.msra.mxu0 %v590
        %1005 = vmatprep.subr.mxu0 0.0
        %1006 = vmatpush1.msra.mxu0 %v591
        %1007 = vmatprep.subr.mxu0 0.0
        %1008 = vmatpush1.msra.mxu0 %v592
        %1009 = vmatprep.subr.mxu0 0.0
        %1010 = vmatpush1.msra.mxu0 %v593
        %1011 = vmatprep.subr.mxu0 0.0
        %1012 = vmatpush1.msra.mxu0 %v594
        %1013 = vmatprep.subr.mxu0 0.0
        %1014 = vmatpush1.msra.mxu0 %v595
        %1015 = vmatprep.subr.mxu0 0.0
        %1016 = vmatpush1.msra.mxu0 %v596
        %1017 = vmatprep.subr.mxu0 0.0
        %1018 = vmatpush1.msra.mxu0 %v597
        %1019 = vmatprep.subr.mxu0 0.0
        %1020 = vmatpush1.msra.mxu0 0.0
        %1021 = vmatprep.subr.mxu0 0.0
        %1022 = vmatpush1.msra.mxu0 0.0
        %1023 = vmatprep.subr.mxu0 0.0
        %1024 = vmatpush1.msra.mxu0 0.0
        %1025 = vmatprep.subr.mxu0 0.0
        %1026 = vmatpush1.msra.mxu0 0.0
        %1027 = vmatprep.subr.mxu0 0.0
        %1028 = vmatpush1.msra.mxu0 0.0
        %1029 = vmatprep.subr.mxu0 0.0
        %1030 = vmatpush1.msra.mxu0 0.0
        %1031 = vmatprep.subr.mxu0 0.0
        %1032 = vmatpush1.msra.mxu0 0.0
        %1033 = vmatprep.subr.mxu0 0.0
        %1034 = vmatpush1.msra.mxu0 0.0
        %1035 = vmatprep.subr.mxu0 0.0
        %1036 = vmatpush1.msra.mxu0 0.0
        %1037 = vmatprep.subr.mxu0 0.0
        %1038 = vmatpush1.msra.mxu0 0.0
        %1039 = vmatprep.subr.mxu0 0.0
        %1040 = vmatpush1.msra.mxu0 0.0
        %1041 = vmatprep.subr.mxu0 0.0
        %1042 = vmatpush1.msra.mxu0 0.0
        %1043 = vmatprep.subr.mxu0 0.0
        %1044 = vmatpush1.msra.mxu0 0.0
        %1045 = vmatprep.subr.mxu0 0.0
        %1046 = vmatpush1.msra.mxu0 0.0
        %1047 = vmatprep.subr.mxu0 0.0
        %1048 = vmatpush1.msra.mxu0 0.0
        %1049 = vmatprep.subr.mxu0 0.0
        %1050 = vmatpush1.msra.mxu0 0.0
        %1051 = vmatprep.mubr.f32.mxu0 0.0
        %1052 = vmatmul.mubr.f32.gmra.mrb[0].mxu0 %v977
        %v1053 = vpop.f32.mrb[0].mxu0
        %v1054 = vadd.f32 %v985, %v1053
        %v1055 = vpop.f32.mrb[0].mxu0
        %1056 = vdwg.mxu0
        %1057 = vst [vmem:[%s530] sm:$0xff] %v1054
        %s1058 = sand.u32 %s287, 1
        %s1059 = scalar_lea.sflag [#allocation4], %s1058
        %s1060 = sand.u32 %s287, 1
        %s1061 = smul.addr %s1060, 8
        %s1062 = scalar_lea.vmem [#allocation14], %s1061
        // Predicated region
        $region93: #{tpu_custom_call.1} parent=63 // pred_check
          %p1063 = pneg %p297
        $region94: #{tpu_custom_call.1} parent=63 // pred_check_branch
          %1065 = sbr.rel (%p1063) target = $region96
        $region95: #{tpu_custom_call.1} parent=63 // pred_region
          %s1067 = ssub.s32 128, 128
          %1068 = vsyncadd %s1059, %s1067
          %s1069 = smul.addr %s33, 128
          %s1070 = scalar_lea.hbm %s11, %s1069
          %s1072 = sshll.u32 %s1062, 4
          %s1073 = int_to_ptr.vmem [resolvable:$true] %s1072
          %1075 = dma.vmem_to_hbm [thread:$0]  %s1073, 128, %s1070, %s1059
        $region96: #{tpu_custom_call.1} parent=63 // pred_fallthru
          _
      $region64: #{tpu_custom_call.1} parent=5 // pred_fallthru
        _
      %p1076 = scmp.le.s32.totalorder 2, %s28
      // Predicated region
      $region97: #{tpu_custom_call.1} parent=5 // pred_check
        %p1077 = pneg %p1076
      $region98: #{tpu_custom_call.1} parent=5 // pred_check_branch
        %1079 = sbr.rel (%p1077) target = $region100
      $region99: #{tpu_custom_call.1} parent=5 // pred_region
        %s1080 = ssub.s32 %s28, 2
        // Predicated region
        $region101: #{tpu_custom_call.1} parent=99 // pred_check
          %p1081 = pneg %p303
        $region102: #{tpu_custom_call.1} parent=99 // pred_check_branch
          %1083 = sbr.rel (%p1081) target = $region104
        $region103: #{tpu_custom_call.1} parent=99 // pred_region
          %s1084 = sand.u32 %s288, 1
          %s1085 = scalar_lea.sflag [#allocation4], %s1084
          %s1086 = sand.u32 %s288, 1
          %s1087 = smul.addr %s1086, 8
          %s1088 = scalar_lea.vmem [#allocation14], %s1087
          %1089 = dma.done %s1085, 128
        $region104: #{tpu_custom_call.1} parent=99 // pred_fallthru
          _
      $region100: #{tpu_custom_call.1} parent=5 // pred_fallthru
        _
    $region6: #{tpu_custom_call.1} parent=1 // loop_footer
      %s32 = sadd.s32 1, %s28
    $region7: #{tpu_custom_call.1} parent=1 // loop_footer_branch
      %27 = sbr.rel target = $region3
    $region8: #{tpu_custom_call.1} parent=1 // loop_exit
      _
    %1090 = vsyncpa [#allocation3], 1
    %s1091 = scalar_lea.sflag [#allocation3], 1
    %1092 = vsyncpa %s1091, 1
    %1093 = vsyncpa [#allocation6], 1
    %s1094 = scalar_lea.sflag [#allocation6], 1
    %1095 = vsyncpa %s1094, 1
    %1096 = vsyncpa [#allocation9], 1
    %1097 = vsyncpa [#allocation12], 1
    %1098 = vsyncpa [#allocation4], 1
    %s1099 = scalar_lea.sflag [#allocation4], 1
    %1100 = vsyncpa %s1099, 1

</llo_original>
